<compile_context>
chip_gen: v7x
topology: tpu7x:2x2x1
jax: 0.10.0
libtpu: 0.0.40
codegen_flags: <defaults>
</compile_context>

<pallas_src>
import functools

import jax
import jax.numpy as jnp
from jax.experimental import pallas as pl
from jax.experimental.pallas import tpu as pltpu


def _osg_decoder_kernel(x_ref, w1_ref, b1_ref, w2t_ref, b2t_ref, out_ref, *,
                        softplus_dtype):
    # Layer 1 (row-major): (tm, C) @ (C, H) + (1, H); bf16 operands, f32 acc.
    x = x_ref[...].astype(jnp.bfloat16)
    h = jnp.dot(x, w1_ref[...], preferred_element_type=jnp.float32) + b1_ref[...]

    # Softplus (torch defaults: beta=1, threshold=20).  Transcendentals may run
    # in bf16 on v6e/v7x; compares/selects stay in f32.
    hc = jnp.minimum(h, 20.0).astype(softplus_dtype)
    sp = jnp.log1p(jnp.exp(hc)).astype(jnp.float32)
    h = jnp.where(h > 20.0, h, sp)

    # Transpose rows -> lanes once (f32, native (*,128) tile; XLU has slack) so
    # layer 2, the sigmoid and the output store are lane-dense along rows.
    h_t = h.T.astype(jnp.bfloat16)                       # (H, tm)

    # Layer 2 (transposed): (out_dim, H) @ (H, tm) + (out_dim, 1).
    y = jnp.dot(w2t_ref[...], h_t, preferred_element_type=jnp.float32) + b2t_ref[...]

    # Row 0 -> sigma (raw linear output); rows 1: -> sigmoid(y)*(1+2e-3)-1e-3.
    row = jax.lax.broadcasted_iota(jnp.int32, y.shape, 0)
    rgb_like = jax.nn.sigmoid(y) * (1.0 + 2.0 * 0.001) - 0.001
    out_ref[...] = jnp.where(row == 0, y, rgb_like).astype(out_ref.dtype)


def _default_softplus_dtype():
    # bf16 transcendentals only pay off (and are only natively supported by the
    # EUP) on v6e/v7x; keep f32 on v5e and unknown backends.
    try:
        kind = jax.devices()[0].device_kind.lower()
    except Exception:
        return jnp.float32
    if "v6" in kind or "v7" in kind:
        return jnp.bfloat16
    return jnp.float32


def _choose_row_tile(rows, row_tile, in_itemsize, vmem_budget_bytes):
    """Pick a row tile: as large as the VMEM budget allows, multiple of 128."""
    # Rough per-row VMEM footprint (bytes):
    #   input block lane-padded from C to 128 lanes, double-buffered
    #   f32 hidden (128) + bf16 copy + transposed bf16 copy + softplus temps
    #   f32 output block (<=8 sublanes x tm lanes), double-buffered
    per_row = 128 * in_itemsize * 2 + 128 * (4 + 2 + 2 + 4) + 8 * 4 * 2
    cap = max(128, vmem_budget_bytes // per_row)
    tm = min(row_tile, rows, cap)
    tm = max(128, (tm // 128) * 128)
    # Prefer >= 8 grid steps (keeps both v7x TensorCores busy) as long as the
    # tile stays at/above the ~512-row knee of the tile-size/roofline curve.
    while tm > 512 and (rows + tm - 1) // tm < 8:
        tm //= 2
    return tm


def osg_decoder_forward(sampled_features, params, *, row_tile=2048,
                        vmem_budget_bytes=12 * 1024 * 1024,
                        softplus_dtype=None):
    """Pallas implementation of OSGDecoder.forward.

    sampled_features: (N, M, C) or (R, C) float array.
    params: dict with w1 (C, H), b1 (H,), w2 (H, out_dim), b2 (out_dim,).
    Returns (rgb, sigma) with shapes (R, out_dim-1) and (R, 1), R = N*M.
    """
    x = sampled_features
    if x.ndim == 3:
        n, m, c = x.shape
        x = x.reshape(n * m, c)
    rows, c = x.shape

    w1, b1, w2, b2 = params["w1"], params["b1"], params["w2"], params["b2"]
    hidden = w1.shape[1]
    out_dim = w2.shape[1]

    if softplus_dtype is None:
        softplus_dtype = _default_softplus_dtype()

    itemsize = jnp.dtype(x.dtype).itemsize
    tm = _choose_row_tile(rows, row_tile, itemsize, vmem_budget_bytes)
    padded_rows = ((rows + tm - 1) // tm) * tm
    if padded_rows != rows:
        x = jnp.pad(x, ((0, padded_rows - rows), (0, 0)))

    # Parameter prep (tiny, once per call): bf16 matmul operands, f32 biases.
    w1_bf = w1.astype(jnp.bfloat16)                       # (C, H)
    b1_row = b1.reshape(1, hidden).astype(jnp.float32)    # (1, H)
    w2t_bf = w2.T.astype(jnp.bfloat16)                    # (out_dim, H)
    b2_col = b2.reshape(out_dim, 1).astype(jnp.float32)   # (out_dim, 1)

    kernel = functools.partial(_osg_decoder_kernel, softplus_dtype=softplus_dtype)

    flops = 2 * padded_rows * (c * hidden + hidden * out_dim)
    transcendentals = padded_rows * (2 * hidden + out_dim)
    bytes_accessed = (padded_rows * c * itemsize
                      + padded_rows * out_dim * 4
                      + (c * hidden + hidden + hidden * out_dim + out_dim) * 4)

    # Note: weights/biases use constant index_maps so Pallas keeps them
    # resident; pl.Buffered(1) would only trim a few KiB of VMEM and is omitted.
    out_t = pl.pallas_call(
        kernel,
        out_shape=jax.ShapeDtypeStruct((out_dim, padded_rows), jnp.float32),
        grid_spec=pltpu.PrefetchScalarGridSpec(
            num_scalar_prefetch=0,
            grid=(padded_rows // tm,),
            in_specs=[
                pl.BlockSpec((tm, c), lambda i: (i, 0)),
                pl.BlockSpec((c, hidden), lambda i: (0, 0)),
                pl.BlockSpec((1, hidden), lambda i: (0, 0)),
                pl.BlockSpec((out_dim, hidden), lambda i: (0, 0)),
                pl.BlockSpec((out_dim, 1), lambda i: (0, 0)),
            ],
            out_specs=pl.BlockSpec((out_dim, tm), lambda i: (0, i)),
        ),
        compiler_params=pltpu.CompilerParams(
            dimension_semantics=("parallel",),
            vmem_limit_bytes=32 * 1024 * 1024,
        ),
        cost_estimate=pl.CostEstimate(
            flops=flops,
            transcendentals=transcendentals,
            bytes_accessed=bytes_accessed,
        ),
    )(x, w1_bf, b1_row, w2t_bf, b2_col)

    out_t = out_t[:, :rows]                  # (out_dim, rows), lane-dense store
    sigma = out_t[0].reshape(rows, 1)        # raw linear output (no sigmoid)
    rgb = jnp.transpose(out_t[1:], (1, 0))   # (rows, out_dim - 1)
    return rgb, sigma


def init_params(key, n_features, out_dim, hidden_dim=128, dtype=jnp.float32):
    """Deterministic init matching nn.Linear default (U[-1/sqrt(fan_in), +])."""
    k1, k2, k3, k4 = jax.random.split(key, 4)
    lim1 = 1.0 / jnp.sqrt(n_features)
    lim2 = 1.0 / jnp.sqrt(hidden_dim)
    return {
        "w1": jax.random.uniform(k1, (n_features, hidden_dim), dtype, -lim1, lim1),
        "b1": jax.random.uniform(k2, (hidden_dim,), dtype, -lim1, lim1),
        "w2": jax.random.uniform(k3, (hidden_dim, out_dim), dtype, -lim2, lim2),
        "b2": jax.random.uniform(k4, (out_dim,), dtype, -lim2, lim2),
    }


def _reference_forward(sampled_features, params):
    """Pure-JAX f32 reference mirroring the PyTorch module."""
    x = sampled_features
    if x.ndim == 3:
        n, m, c = x.shape
        x = x.reshape(n * m, c)
    h = x @ params["w1"] + params["b1"]
    h = jnp.where(h > 20.0, h, jnp.log1p(jnp.exp(jnp.minimum(h, 20.0))))
    y = h @ params["w2"] + params["b2"]
    rgb = jax.nn.sigmoid(y[:, 1:]) * (1.0 + 2.0 * 0.001) - 0.001
    sigma = y[:, 0:1]
    return rgb, sigma


if __name__ == "__main__":
    key = jax.random.PRNGKey(0)
    k_feat, k_feat2, k_param = jax.random.split(key, 3)

    C, OUT_DIM = 16, 4
    params = init_params(k_param, n_features=C, out_dim=OUT_DIM)

    # Case 1: (N, M, C) = (2, 64, 16) — single-block grid.
    N, M = 2, 64
    sf = jax.random.normal(k_feat, (N, M, C), dtype=jnp.float32)
    rgb, sigma = osg_decoder_forward(sf, params)
    rgb = jax.block_until_ready(rgb)
    sigma = jax.block_until_ready(sigma)
    rgb_ref, sigma_ref = _reference_forward(sf, params)
    assert rgb.shape == (N * M, OUT_DIM - 1), rgb.shape
    assert sigma.shape == (N * M, 1), sigma.shape
    # bf16 matmul operands (+ bf16 softplus on v6e/v7x) vs f32 reference.
    assert jnp.allclose(rgb, rgb_ref, atol=3e-2, rtol=3e-2)
    assert jnp.allclose(sigma, sigma_ref, atol=3e-2, rtol=3e-2)

    # Case 2: multi-block grid with row padding (rows not a tile multiple).
    N2, M2 = 3, 1000
    sf2 = jax.random.normal(k_feat2, (N2, M2, C), dtype=jnp.float32)
    rgb2, sigma2 = osg_decoder_forward(sf2, params, row_tile=512)
    rgb2 = jax.block_until_ready(rgb2)
    sigma2 = jax.block_until_ready(sigma2)
    rgb2_ref, sigma2_ref = _reference_forward(sf2, params)
    assert rgb2.shape == (N2 * M2, OUT_DIM - 1), rgb2.shape
    assert sigma2.shape == (N2 * M2, 1), sigma2.shape
    assert jnp.allclose(rgb2, rgb2_ref, atol=3e-2, rtol=3e-2)
    assert jnp.allclose(sigma2, sigma2_ref, atol=3e-2, rtol=3e-2)

    print("KERNEL_OK")
</pallas_src>

<mosaic_0001>
module attributes {stable_mosaic.version = 11 : i64} {
  func.func @_osg_decoder_kernel(%arg0: i32, %arg1: memref<128x16xf32, #tpu.memory_space<vmem>>, %arg2: memref<16x128xbf16, #tpu.memory_space<vmem>>, %arg3: memref<1x128xf32, #tpu.memory_space<vmem>>, %arg4: memref<4x128xbf16, #tpu.memory_space<vmem>>, %arg5: memref<4x1xf32, #tpu.memory_space<vmem>>, %arg6: memref<4x128xf32, #tpu.memory_space<vmem>>) attributes {dimension_semantics = [#tpu.dimension_semantics<parallel>], iteration_bounds = array<i64: 1>, scalar_prefetch = 0 : i64, scratch_operands = 0 : i64, tpu.core_type = #tpu.core_type<tc>, window_params = [{transform_indices = @transform_0, window_bounds = array<i64: 128, 16>}, {pipeline_mode = #tpu.pipeline_mode<synchronous>, transform_indices = @transform_1, window_bounds = array<i64: 16, 128>}, {pipeline_mode = #tpu.pipeline_mode<synchronous>, transform_indices = @transform_2, window_bounds = array<i64: 1, 128>}, {pipeline_mode = #tpu.pipeline_mode<synchronous>, transform_indices = @transform_3, window_bounds = array<i64: 4, 128>}, {pipeline_mode = #tpu.pipeline_mode<synchronous>, transform_indices = @transform_4, window_bounds = array<i64: 4, 1>}, {transform_indices = @transform_5, window_bounds = array<i64: 4, 128>}]} {
    %c0 = arith.constant 0 : index
    %c0_0 = arith.constant 0 : index
    %0 = vector.load %arg1[%c0, %c0_0] : memref<128x16xf32, #tpu.memory_space<vmem>>, vector<128x16xf32>
    %1 = arith.truncf %0 : vector<128x16xf32> to vector<128x16xbf16>
    %c0_1 = arith.constant 0 : index
    %c0_2 = arith.constant 0 : index
    %2 = vector.load %arg2[%c0_1, %c0_2] : memref<16x128xbf16, #tpu.memory_space<vmem>>, vector<16x128xbf16>
    %cst = arith.constant dense<0.000000e+00> : vector<128x128xf32>
    %3 = tpu.matmul %1, %2, %cst {dimension_numbers = #tpu.dot_dimension_numbers<[1], [0], [0], [1], [0, 0, 1, 1], [], []>} : vector<128x16xbf16>, vector<16x128xbf16>, vector<128x128xf32> -> vector<128x128xf32>
    %c0_3 = arith.constant 0 : index
    %c0_4 = arith.constant 0 : index
    %4 = vector.load %arg3[%c0_3, %c0_4] : memref<1x128xf32, #tpu.memory_space<vmem>>, vector<1x128xf32>
    %5 = vector.broadcast %4 : vector<1x128xf32> to vector<128x128xf32>
    %6 = arith.addf %3, %5 : vector<128x128xf32>
    %cst_5 = arith.constant 2.000000e+01 : f32
    %7 = vector.broadcast %cst_5 : f32 to vector<128x128xf32>
    %8 = arith.minimumf %6, %7 : vector<128x128xf32>
    %9 = math.exp %8 : vector<128x128xf32>
    %10 = math.log1p %9 : vector<128x128xf32>
    %cst_6 = arith.constant 2.000000e+01 : f32
    %11 = vector.broadcast %cst_6 : f32 to vector<128x128xf32>
    %12 = arith.cmpf ogt, %6, %11 : vector<128x128xf32>
    %13 = arith.select %12, %6, %10 : vector<128x128xi1>, vector<128x128xf32>
    %14 = tpu.transpose %13, [1, 0] : vector<128x128xf32> -> vector<128x128xf32>
    %15 = arith.truncf %14 : vector<128x128xf32> to vector<128x128xbf16>
    %c0_7 = arith.constant 0 : index
    %c0_8 = arith.constant 0 : index
    %16 = vector.load %arg4[%c0_7, %c0_8] : memref<4x128xbf16, #tpu.memory_space<vmem>>, vector<4x128xbf16>
    %cst_9 = arith.constant dense<0.000000e+00> : vector<4x128xf32>
    %17 = tpu.matmul %16, %15, %cst_9 {dimension_numbers = #tpu.dot_dimension_numbers<[1], [0], [0], [1], [0, 0, 1, 1], [], []>} : vector<4x128xbf16>, vector<128x128xbf16>, vector<4x128xf32> -> vector<4x128xf32>
    %c0_10 = arith.constant 0 : index
    %c0_11 = arith.constant 0 : index
    %18 = vector.load %arg5[%c0_10, %c0_11] : memref<4x1xf32, #tpu.memory_space<vmem>>, vector<4x1xf32>
    %19 = vector.broadcast %18 : vector<4x1xf32> to vector<4x128xf32>
    %20 = arith.addf %17, %19 : vector<4x128xf32>
    %21 = tpu.iota {dimensions = array<i32: 0>} : vector<4x128xi32>
    %22 = arith.negf %20 : vector<4x128xf32>
    %23 = math.exp %22 : vector<4x128xf32>
    %cst_12 = arith.constant 1.000000e+00 : f32
    %24 = vector.broadcast %cst_12 : f32 to vector<4x128xf32>
    %25 = arith.addf %24, %23 : vector<4x128xf32>
    %26 = arith.divf %24, %25 : vector<4x128xf32>
    %cst_13 = arith.constant 1.002000e+00 : f32
    %27 = vector.broadcast %cst_13 : f32 to vector<4x128xf32>
    %28 = arith.mulf %26, %27 : vector<4x128xf32>
    %cst_14 = arith.constant 1.000000e-03 : f32
    %29 = vector.broadcast %cst_14 : f32 to vector<4x128xf32>
    %30 = arith.subf %28, %29 : vector<4x128xf32>
    %c0_i32 = arith.constant 0 : i32
    %31 = vector.broadcast %c0_i32 : i32 to vector<4x128xi32>
    %32 = arith.cmpi eq, %21, %31 : vector<4x128xi32>
    %33 = arith.select %32, %20, %30 : vector<4x128xi1>, vector<4x128xf32>
    %c0_15 = arith.constant 0 : index
    %c0_16 = arith.constant 0 : index
    %34 = vector.load %arg6[%c0_15, %c0_16] : memref<4x128xf32, #tpu.memory_space<vmem>>, vector<4x128xf32>
    tpu.vector_store %arg6[%c0_15, %c0_16], %33 {strides = array<i32>} : memref<4x128xf32, #tpu.memory_space<vmem>>, vector<4x128xf32>,
    return
  }
  func.func @transform_0(%arg0: i32) -> (i32, i32) {
    %c0_i32 = arith.constant 0 : i32
    %c0_i32_0 = arith.constant 0 : i32
    return %arg0, %c0_i32 : i32, i32
  }
  func.func @transform_1(%arg0: i32) -> (i32, i32) {
    %c0_i32 = arith.constant 0 : i32
    %c0_i32_0 = arith.constant 0 : i32
    %c0_i32_1 = arith.constant 0 : i32
    return %c0_i32, %c0_i32_0 : i32, i32
  }
  func.func @transform_2(%arg0: i32) -> (i32, i32) {
    %c0_i32 = arith.constant 0 : i32
    %c0_i32_0 = arith.constant 0 : i32
    %c0_i32_1 = arith.constant 0 : i32
    return %c0_i32, %c0_i32_0 : i32, i32
  }
  func.func @transform_3(%arg0: i32) -> (i32, i32) {
    %c0_i32 = arith.constant 0 : i32
    %c0_i32_0 = arith.constant 0 : i32
    %c0_i32_1 = arith.constant 0 : i32
    return %c0_i32, %c0_i32_0 : i32, i32
  }
  func.func @transform_4(%arg0: i32) -> (i32, i32) {
    %c0_i32 = arith.constant 0 : i32
    %c0_i32_0 = arith.constant 0 : i32
    %c0_i32_1 = arith.constant 0 : i32
    return %c0_i32, %c0_i32_0 : i32, i32
  }
  func.func @transform_5(%arg0: i32) -> (i32, i32) {
    %c0_i32 = arith.constant 0 : i32
    %c0_i32_0 = arith.constant 0 : i32
    return %c0_i32, %arg0 : i32, i32
  }
}

</mosaic_0001>

<llo_original>
// kernel: tpu_custom_call.1
$region0: #{tpu_custom_call.1}
  #allocation0 [shape = 'u32[]', space=smem, size = 0x4, offset = 0x4, fixed_abs, tag = 'smem constant byte address 0x4 - core index']
  #allocation1 [shape = 'u32[144,128]{1,0:T(1,128)}', space=vmem, size = 0x12000, scoped, tag = 'internal scratch']
  %s0 = inlined_call_operand.vmem [shape: f32[128,16], index: 0, kind: input, shape index: {}]
  %s1 = inlined_call_operand.vmem [shape: bf16[16,128], index: 1, kind: input, shape index: {}]
  %s2 = inlined_call_operand.vmem [shape: f32[1,128], index: 2, kind: input, shape index: {}]
  %s3 = inlined_call_operand.vmem [shape: bf16[4,128], index: 3, kind: input, shape index: {}]
  %s4 = inlined_call_operand.vmem [shape: f32[4,1], index: 4, kind: input, shape index: {}]
  %s5 = inlined_call_operand.hbm [shape: f32[4,128], index: 5, kind: output, shape index: {}]
  %s6 = sld [smem:[#allocation0]]
  $region30: #{tpu_custom_call.1} parent=0
    _
  %s8 = ssub.s32 1, %s6
  %s9 = scalar_select 0, %s8, %s6
  $region1: #{tpu_custom_call.1} parent=0
    #allocation2 [shape = 'u8[2048]{0}', space=vmem, size = 0x800, scoped, tag = 'output window, operand 0, single buffered']
    #allocation3 [shape = 's32[1]{0}', space=sflag, size = 0x4, scoped, tag = 'scoped memory for tpu_custom_call.1']
    %10 = vsyncpa [#allocation3], 0
    // Predicated region
    $region2: #{tpu_custom_call.1} parent=1 // pred_check
      _
    $region3: #{tpu_custom_call.1} parent=1 // pred_check_branch
      %12 = sbr.rel (0) target = $region5
    $region4: #{tpu_custom_call.1} parent=1 // pred_region
      _
    $region5: #{tpu_custom_call.1} parent=1 // pred_fallthru
      _
    // Predicated region
    $region6: #{tpu_custom_call.1} parent=1 // pred_check
      _
    $region7: #{tpu_custom_call.1} parent=1 // pred_check_branch
      %14 = sbr.rel (0) target = $region9
    $region8: #{tpu_custom_call.1} parent=1 // pred_region
      _
    $region9: #{tpu_custom_call.1} parent=1 // pred_fallthru
      _
    // Predicated region
    $region10: #{tpu_custom_call.1} parent=1 // pred_check
      _
    $region11: #{tpu_custom_call.1} parent=1 // pred_check_branch
      %16 = sbr.rel (0) target = $region13
    $region12: #{tpu_custom_call.1} parent=1 // pred_region
      _
    $region13: #{tpu_custom_call.1} parent=1 // pred_fallthru
      _
    // Predicated region
    $region14: #{tpu_custom_call.1} parent=1 // pred_check
      _
    $region15: #{tpu_custom_call.1} parent=1 // pred_check_branch
      %18 = sbr.rel (0) target = $region17
    $region16: #{tpu_custom_call.1} parent=1 // pred_region
      _
    $region17: #{tpu_custom_call.1} parent=1 // pred_fallthru
      _
    // Predicated region
    $region18: #{tpu_custom_call.1} parent=1 // pred_check
      _
    $region19: #{tpu_custom_call.1} parent=1 // pred_check_branch
      %20 = sbr.rel (0) target = $region21
    $region20: #{tpu_custom_call.1} parent=1 // pred_region
      _
    $region21: #{tpu_custom_call.1} parent=1 // pred_fallthru
      _
    %v22 = vld [vmem:[%s0] sm:$0xff]
    %v23 = vld [vmem:[%s0 + $0x8] sm:$0xff]
    %v24 = vld [vmem:[%s0 + $0x10] sm:$0xff]
    %v25 = vld [vmem:[%s0 + $0x18] sm:$0xff]
    %v26 = vld [vmem:[%s0 + $0x20] sm:$0xff]
    %v27 = vld [vmem:[%s0 + $0x28] sm:$0xff]
    %v28 = vld [vmem:[%s0 + $0x30] sm:$0xff]
    %v29 = vld [vmem:[%s0 + $0x38] sm:$0xff]
    %v30 = vld [vmem:[%s0 + $0x40] sm:$0xff]
    %v31 = vld [vmem:[%s0 + $0x48] sm:$0xff]
    %v32 = vld [vmem:[%s0 + $0x50] sm:$0xff]
    %v33 = vld [vmem:[%s0 + $0x58] sm:$0xff]
    %v34 = vld [vmem:[%s0 + $0x60] sm:$0xff]
    %v35 = vld [vmem:[%s0 + $0x68] sm:$0xff]
    %v36 = vld [vmem:[%s0 + $0x70] sm:$0xff]
    %v37 = vld [vmem:[%s0 + $0x78] sm:$0xff]
    %v38 = vpack.c.bf16 %v23, %v22
    %v39 = vpack.c.bf16 %v25, %v24
    %v40 = vpack.c.bf16 %v27, %v26
    %v41 = vpack.c.bf16 %v29, %v28
    %v42 = vpack.c.bf16 %v31, %v30
    %v43 = vpack.c.bf16 %v33, %v32
    %v44 = vpack.c.bf16 %v35, %v34
    %v45 = vpack.c.bf16 %v37, %v36
    %v46 = vld [vmem:[%s1] sm:$0xf]
    %v47 = vld [vmem:[%s1 + $0x4] sm:$0xf]
    %v48 = vld [vmem:[%s2] sm:$0x1]
    %v50 = vlaneseq
    %v51 = vshrl.u32 %v50, 7
    %v52 = vsub.s32 0, %v51
    %v53 = vrot.slane %v48, %v52
    %v57 = vunpack.c.l.b16 %v46
    %v58 = vunpack.c.l.b16 %v47
    %v59 = vpack.c.b16 %v58, %v57
    %vm61 = vcmask 130048
    %v63 = vsel %vm61, %v38, 0
    %v66 = vsel %vm61, %v39, 0
    %v69 = vsel %vm61, %v40, 0
    %v72 = vsel %vm61, %v41, 0
    %v75 = vsel %vm61, %v42, 0
    %v78 = vsel %vm61, %v43, 0
    %v81 = vsel %vm61, %v44, 0
    %v84 = vsel %vm61, %v45, 0
    %86 = vmatprep.subr.bf16.mxu0 0
    %87 = vmatpush1.bf16.msra.mxu0 %v59
    %88 = vmatprep.subr.bf16.mxu0 0
    %89 = vmatpush1.bf16.msra.mxu0 0
    %90 = vmatprep.subr.bf16.mxu0 0
    %91 = vmatpush1.bf16.msra.mxu0 0
    %92 = vmatprep.subr.bf16.mxu0 0
    %93 = vmatpush1.bf16.msra.mxu0 0
    %94 = vmatprep.subr.bf16.mxu0 0
    %95 = vmatpush1.bf16.msra.mxu0 0
    %96 = vmatprep.subr.bf16.mxu0 0
    %97 = vmatpush1.bf16.msra.mxu0 0
    %98 = vmatprep.subr.bf16.mxu0 0
    %99 = vmatpush1.bf16.msra.mxu0 0
    %100 = vmatprep.subr.bf16.mxu0 0
    %101 = vmatpush1.bf16.msra.mxu0 0
    %102 = vmatprep.subr.bf16.mxu0 0
    %103 = vmatpush1.bf16.msra.mxu0 0
    %104 = vmatprep.subr.bf16.mxu0 0
    %105 = vmatpush1.bf16.msra.mxu0 0
    %106 = vmatprep.subr.bf16.mxu0 0
    %107 = vmatpush1.bf16.msra.mxu0 0
    %108 = vmatprep.subr.bf16.mxu0 0
    %109 = vmatpush1.bf16.msra.mxu0 0
    %110 = vmatprep.subr.bf16.mxu0 0
    %111 = vmatpush1.bf16.msra.mxu0 0
    %112 = vmatprep.subr.bf16.mxu0 0
    %113 = vmatpush1.bf16.msra.mxu0 0
    %114 = vmatprep.subr.bf16.mxu0 0
    %115 = vmatpush1.bf16.msra.mxu0 0
    %116 = vmatprep.subr.bf16.mxu0 0
    %117 = vmatpush1.bf16.msra.mxu0 0
    %118 = vmatprep.mubr.bf16.mxu0 0
    %119 = vmatmul.mubr.bf16.gmra.mrb[0].mxu0 %v63
    %v120 = vpop.f32.mrb[0].mxu0
    %v121 = vadd.f32 %v53, %v120
    %v122 = vpop.f32.mrb[0].mxu0
    %v123 = vpop.f32.mrb[0].mxu0
    %v124 = vadd.f32 %v53, %v123
    %v125 = vpop.f32.mrb[0].mxu0
    %126 = vmatprep.mubr.bf16.mxu0 0
    %127 = vmatmul.mubr.bf16.gmra.mrb[0].mxu0 %v66
    %v128 = vpop.f32.mrb[0].mxu0
    %v129 = vadd.f32 %v53, %v128
    %v130 = vpop.f32.mrb[0].mxu0
    %v131 = vpop.f32.mrb[0].mxu0
    %v132 = vadd.f32 %v53, %v131
    %v133 = vpop.f32.mrb[0].mxu0
    %134 = vmatprep.mubr.bf16.mxu0 0
    %135 = vmatmul.mubr.bf16.gmra.mrb[0].mxu0 %v69
    %v136 = vpop.f32.mrb[0].mxu0
    %v137 = vadd.f32 %v53, %v136
    %v138 = vpop.f32.mrb[0].mxu0
    %v139 = vpop.f32.mrb[0].mxu0
    %v140 = vadd.f32 %v53, %v139
    %v141 = vpop.f32.mrb[0].mxu0
    %142 = vmatprep.mubr.bf16.mxu0 0
    %143 = vmatmul.mubr.bf16.gmra.mrb[0].mxu0 %v72
    %v144 = vpop.f32.mrb[0].mxu0
    %v145 = vadd.f32 %v53, %v144
    %v146 = vpop.f32.mrb[0].mxu0
    %v147 = vpop.f32.mrb[0].mxu0
    %v148 = vadd.f32 %v53, %v147
    %v149 = vpop.f32.mrb[0].mxu0
    %150 = vmatprep.mubr.bf16.mxu0 0
    %151 = vmatmul.mubr.bf16.gmra.mrb[0].mxu0 %v75
    %v152 = vpop.f32.mrb[0].mxu0
    %v153 = vadd.f32 %v53, %v152
    %v154 = vpop.f32.mrb[0].mxu0
    %v155 = vpop.f32.mrb[0].mxu0
    %v156 = vadd.f32 %v53, %v155
    %v157 = vpop.f32.mrb[0].mxu0
    %158 = vmatprep.mubr.bf16.mxu0 0
    %159 = vmatmul.mubr.bf16.gmra.mrb[0].mxu0 %v78
    %v160 = vpop.f32.mrb[0].mxu0
    %v161 = vadd.f32 %v53, %v160
    %v162 = vpop.f32.mrb[0].mxu0
    %v163 = vpop.f32.mrb[0].mxu0
    %v164 = vadd.f32 %v53, %v163
    %v165 = vpop.f32.mrb[0].mxu0
    %166 = vmatprep.mubr.bf16.mxu0 0
    %167 = vmatmul.mubr.bf16.gmra.mrb[0].mxu0 %v81
    %v168 = vpop.f32.mrb[0].mxu0
    %v169 = vadd.f32 %v53, %v168
    %v170 = vpop.f32.mrb[0].mxu0
    %v171 = vpop.f32.mrb[0].mxu0
    %v172 = vadd.f32 %v53, %v171
    %v173 = vpop.f32.mrb[0].mxu0
    %174 = vmatprep.mubr.bf16.mxu0 0
    %175 = vmatmul.mubr.bf16.gmra.mrb[0].mxu0 %v84
    %v176 = vpop.f32.mrb[0].mxu0
    %v177 = vadd.f32 %v53, %v176
    %v178 = vpop.f32.mrb[0].mxu0
    %v179 = vpop.f32.mrb[0].mxu0
    %v180 = vadd.f32 %v53, %v179
    %v181 = vpop.f32.mrb[0].mxu0
    %182 = vdwg.mxu0
    %v183 = vmin.f32 %v121, 20.0
    %v184 = vmin.f32 %v124, 20.0
    %v185 = vmin.f32 %v129, 20.0
    %v186 = vmin.f32 %v132, 20.0
    %v187 = vmin.f32 %v137, 20.0
    %v188 = vmin.f32 %v140, 20.0
    %v189 = vmin.f32 %v145, 20.0
    %v190 = vmin.f32 %v148, 20.0
    %v191 = vmin.f32 %v153, 20.0
    %v192 = vmin.f32 %v156, 20.0
    %v193 = vmin.f32 %v161, 20.0
    %v194 = vmin.f32 %v164, 20.0
    %v195 = vmin.f32 %v169, 20.0
    %v196 = vmin.f32 %v172, 20.0
    %v197 = vmin.f32 %v177, 20.0
    %v198 = vmin.f32 %v180, 20.0
    %v199 = vmul.f32 %v183, 1.442695
    %v200 = vpow.pop %v199
    %v201 = vmul.f32 %v184, 1.442695
    %v202 = vpow.pop %v201
    %v203 = vmul.f32 %v185, 1.442695
    %v204 = vpow.pop %v203
    %v205 = vmul.f32 %v186, 1.442695
    %v206 = vpow.pop %v205
    %v207 = vmul.f32 %v187, 1.442695
    %v208 = vpow.pop %v207
    %v209 = vmul.f32 %v188, 1.442695
    %v210 = vpow.pop %v209
    %v211 = vmul.f32 %v189, 1.442695
    %v212 = vpow.pop %v211
    %v213 = vmul.f32 %v190, 1.442695
    %v214 = vpow.pop %v213
    %v215 = vmul.f32 %v191, 1.442695
    %v216 = vpow.pop %v215
    %v217 = vmul.f32 %v192, 1.442695
    %v218 = vpow.pop %v217
    %v219 = vmul.f32 %v193, 1.442695
    %v220 = vpow.pop %v219
    %v221 = vmul.f32 %v194, 1.442695
    %v222 = vpow.pop %v221
    %v223 = vmul.f32 %v195, 1.442695
    %v224 = vpow.pop %v223
    %v225 = vmul.f32 %v196, 1.442695
    %v226 = vpow.pop %v225
    %v227 = vmul.f32 %v197, 1.442695
    %v228 = vpow.pop %v227
    %v229 = vmul.f32 %v198, 1.442695
    %v230 = vpow.pop %v229
    %v231 = vadd.f32 %v200, 1.0
    %v232 = vlog2.pop %v231
    %v233 = vmul.f32 %v232, 0.6931472
    %v234 = vmul.f32 -0.5, %v200
    %v235 = vadd.f32 %v234, 1.0
    %v236 = vmul.f32 %v235, %v200
    %v237 = vand.u32 2147483647, %v200
    %vm238 = vcmp.lt.f32.partialorder %v237, 0.0004427343
    %v239 = vsel %vm238, %v236, %v233
    %v240 = vadd.f32 %v202, 1.0
    %v241 = vlog2.pop %v240
    %v242 = vmul.f32 %v241, 0.6931472
    %v243 = vmul.f32 -0.5, %v202
    %v244 = vadd.f32 %v243, 1.0
    %v245 = vmul.f32 %v244, %v202
    %v246 = vand.u32 2147483647, %v202
    %vm247 = vcmp.lt.f32.partialorder %v246, 0.0004427343
    %v248 = vsel %vm247, %v245, %v242
    %v249 = vadd.f32 %v204, 1.0
    %v250 = vlog2.pop %v249
    %v251 = vmul.f32 %v250, 0.6931472
    %v252 = vmul.f32 -0.5, %v204
    %v253 = vadd.f32 %v252, 1.0
    %v254 = vmul.f32 %v253, %v204
    %v255 = vand.u32 2147483647, %v204
    %vm256 = vcmp.lt.f32.partialorder %v255, 0.0004427343
    %v257 = vsel %vm256, %v254, %v251
    %v258 = vadd.f32 %v206, 1.0
    %v259 = vlog2.pop %v258
    %v260 = vmul.f32 %v259, 0.6931472
    %v261 = vmul.f32 -0.5, %v206
    %v262 = vadd.f32 %v261, 1.0
    %v263 = vmul.f32 %v262, %v206
    %v264 = vand.u32 2147483647, %v206
    %vm265 = vcmp.lt.f32.partialorder %v264, 0.0004427343
    %v266 = vsel %vm265, %v263, %v260
    %v267 = vadd.f32 %v208, 1.0
    %v268 = vlog2.pop %v267
    %v269 = vmul.f32 %v268, 0.6931472
    %v270 = vmul.f32 -0.5, %v208
    %v271 = vadd.f32 %v270, 1.0
    %v272 = vmul.f32 %v271, %v208
    %v273 = vand.u32 2147483647, %v208
    %vm274 = vcmp.lt.f32.partialorder %v273, 0.0004427343
    %v275 = vsel %vm274, %v272, %v269
    %v276 = vadd.f32 %v210, 1.0
    %v277 = vlog2.pop %v276
    %v278 = vmul.f32 %v277, 0.6931472
    %v279 = vmul.f32 -0.5, %v210
    %v280 = vadd.f32 %v279, 1.0
    %v281 = vmul.f32 %v280, %v210
    %v282 = vand.u32 2147483647, %v210
    %vm283 = vcmp.lt.f32.partialorder %v282, 0.0004427343
    %v284 = vsel %vm283, %v281, %v278
    %v285 = vadd.f32 %v212, 1.0
    %v286 = vlog2.pop %v285
    %v287 = vmul.f32 %v286, 0.6931472
    %v288 = vmul.f32 -0.5, %v212
    %v289 = vadd.f32 %v288, 1.0
    %v290 = vmul.f32 %v289, %v212
    %v291 = vand.u32 2147483647, %v212
    %vm292 = vcmp.lt.f32.partialorder %v291, 0.0004427343
    %v293 = vsel %vm292, %v290, %v287
    %v294 = vadd.f32 %v214, 1.0
    %v295 = vlog2.pop %v294
    %v296 = vmul.f32 %v295, 0.6931472
    %v297 = vmul.f32 -0.5, %v214
    %v298 = vadd.f32 %v297, 1.0
    %v299 = vmul.f32 %v298, %v214
    %v300 = vand.u32 2147483647, %v214
    %vm301 = vcmp.lt.f32.partialorder %v300, 0.0004427343
    %v302 = vsel %vm301, %v299, %v296
    %v303 = vadd.f32 %v216, 1.0
    %v304 = vlog2.pop %v303
    %v305 = vmul.f32 %v304, 0.6931472
    %v306 = vmul.f32 -0.5, %v216
    %v307 = vadd.f32 %v306, 1.0
    %v308 = vmul.f32 %v307, %v216
    %v309 = vand.u32 2147483647, %v216
    %vm310 = vcmp.lt.f32.partialorder %v309, 0.0004427343
    %v311 = vsel %vm310, %v308, %v305
    %v312 = vadd.f32 %v218, 1.0
    %v313 = vlog2.pop %v312
    %v314 = vmul.f32 %v313, 0.6931472
    %v315 = vmul.f32 -0.5, %v218
    %v316 = vadd.f32 %v315, 1.0
    %v317 = vmul.f32 %v316, %v218
    %v318 = vand.u32 2147483647, %v218
    %vm319 = vcmp.lt.f32.partialorder %v318, 0.0004427343
    %v320 = vsel %vm319, %v317, %v314
    %v321 = vadd.f32 %v220, 1.0
    %v322 = vlog2.pop %v321
    %v323 = vmul.f32 %v322, 0.6931472
    %v324 = vmul.f32 -0.5, %v220
    %v325 = vadd.f32 %v324, 1.0
    %v326 = vmul.f32 %v325, %v220
    %v327 = vand.u32 2147483647, %v220
    %vm328 = vcmp.lt.f32.partialorder %v327, 0.0004427343
    %v329 = vsel %vm328, %v326, %v323
    %v330 = vadd.f32 %v222, 1.0
    %v331 = vlog2.pop %v330
    %v332 = vmul.f32 %v331, 0.6931472
    %v333 = vmul.f32 -0.5, %v222
    %v334 = vadd.f32 %v333, 1.0
    %v335 = vmul.f32 %v334, %v222
    %v336 = vand.u32 2147483647, %v222
    %vm337 = vcmp.lt.f32.partialorder %v336, 0.0004427343
    %v338 = vsel %vm337, %v335, %v332
    %v339 = vadd.f32 %v224, 1.0
    %v340 = vlog2.pop %v339
    %v341 = vmul.f32 %v340, 0.6931472
    %v342 = vmul.f32 -0.5, %v224
    %v343 = vadd.f32 %v342, 1.0
    %v344 = vmul.f32 %v343, %v224
    %v345 = vand.u32 2147483647, %v224
    %vm346 = vcmp.lt.f32.partialorder %v345, 0.0004427343
    %v347 = vsel %vm346, %v344, %v341
    %v348 = vadd.f32 %v226, 1.0
    %v349 = vlog2.pop %v348
    %v350 = vmul.f32 %v349, 0.6931472
    %v351 = vmul.f32 -0.5, %v226
    %v352 = vadd.f32 %v351, 1.0
    %v353 = vmul.f32 %v352, %v226
    %v354 = vand.u32 2147483647, %v226
    %vm355 = vcmp.lt.f32.partialorder %v354, 0.0004427343
    %v356 = vsel %vm355, %v353, %v350
    %v357 = vadd.f32 %v228, 1.0
    %v358 = vlog2.pop %v357
    %v359 = vmul.f32 %v358, 0.6931472
    %v360 = vmul.f32 -0.5, %v228
    %v361 = vadd.f32 %v360, 1.0
    %v362 = vmul.f32 %v361, %v228
    %v363 = vand.u32 2147483647, %v228
    %vm364 = vcmp.lt.f32.partialorder %v363, 0.0004427343
    %v365 = vsel %vm364, %v362, %v359
    %v366 = vadd.f32 %v230, 1.0
    %v367 = vlog2.pop %v366
    %v368 = vmul.f32 %v367, 0.6931472
    %v369 = vmul.f32 -0.5, %v230
    %v370 = vadd.f32 %v369, 1.0
    %v371 = vmul.f32 %v370, %v230
    %v372 = vand.u32 2147483647, %v230
    %vm373 = vcmp.lt.f32.partialorder %v372, 0.0004427343
    %v374 = vsel %vm373, %v371, %v368
    %vm375 = vcmp.gt.f32.partialorder %v121, 20.0
    %vm376 = vcmp.gt.f32.partialorder %v124, 20.0
    %vm377 = vcmp.gt.f32.partialorder %v129, 20.0
    %vm378 = vcmp.gt.f32.partialorder %v132, 20.0
    %vm379 = vcmp.gt.f32.partialorder %v137, 20.0
    %vm380 = vcmp.gt.f32.partialorder %v140, 20.0
    %vm381 = vcmp.gt.f32.partialorder %v145, 20.0
    %vm382 = vcmp.gt.f32.partialorder %v148, 20.0
    %vm383 = vcmp.gt.f32.partialorder %v153, 20.0
    %vm384 = vcmp.gt.f32.partialorder %v156, 20.0
    %vm385 = vcmp.gt.f32.partialorder %v161, 20.0
    %vm386 = vcmp.gt.f32.partialorder %v164, 20.0
    %vm387 = vcmp.gt.f32.partialorder %v169, 20.0
    %vm388 = vcmp.gt.f32.partialorder %v172, 20.0
    %vm389 = vcmp.gt.f32.partialorder %v177, 20.0
    %vm390 = vcmp.gt.f32.partialorder %v180, 20.0
    %v391 = vsel %vm375, %v121, %v239
    %v392 = vsel %vm376, %v124, %v248
    %v393 = vsel %vm377, %v129, %v257
    %v394 = vsel %vm378, %v132, %v266
    %v395 = vsel %vm379, %v137, %v275
    %v396 = vsel %vm380, %v140, %v284
    %v397 = vsel %vm381, %v145, %v293
    %v398 = vsel %vm382, %v148, %v302
    %v399 = vsel %vm383, %v153, %v311
    %v400 = vsel %vm384, %v156, %v320
    %v401 = vsel %vm385, %v161, %v329
    %v402 = vsel %vm386, %v164, %v338
    %v403 = vsel %vm387, %v169, %v347
    %v404 = vsel %vm388, %v172, %v356
    %v405 = vsel %vm389, %v177, %v365
    %v406 = vsel %vm390, %v180, %v374
    %407 = vxpose.xlu0.b32.start [1/16] %v391, 128
    %408 = vxpose.xlu0.b32.cont [2/16] %v392, 128
    %409 = vxpose.xlu0.b32.cont [3/16] %v393, 128
    %410 = vxpose.xlu0.b32.cont [4/16] %v394, 128
    %411 = vxpose.xlu0.b32.cont [5/16] %v395, 128
    %412 = vxpose.xlu0.b32.cont [6/16] %v396, 128
    %413 = vxpose.xlu0.b32.cont [7/16] %v397, 128
    %414 = vxpose.xlu0.b32.cont [8/16] %v398, 128
    %415 = vxpose.xlu0.b32.cont [9/16] %v399, 128
    %416 = vxpose.xlu0.b32.cont [10/16] %v400, 128
    %417 = vxpose.xlu0.b32.cont [11/16] %v401, 128
    %418 = vxpose.xlu0.b32.cont [12/16] %v402, 128
    %419 = vxpose.xlu0.b32.cont [13/16] %v403, 128
    %420 = vxpose.xlu0.b32.cont [14/16] %v404, 128
    %421 = vxpose.xlu0.b32.cont [15/16] %v405, 128
    %422 = vxpose.xlu0.b32.end [16/16] %v406, 128
    %v423 = vpop.trf.xlu0
    %v424 = vpop.trf.xlu0
    %v425 = vpop.trf.xlu0
    %v426 = vpop.trf.xlu0
    %v427 = vpop.trf.xlu0
    %v428 = vpop.trf.xlu0
    %v429 = vpop.trf.xlu0
    %v430 = vpop.trf.xlu0
    %v431 = vpop.trf.xlu0
    %v432 = vpop.trf.xlu0
    %v433 = vpop.trf.xlu0
    %v434 = vpop.trf.xlu0
    %v435 = vpop.trf.xlu0
    %v436 = vpop.trf.xlu0
    %v437 = vpop.trf.xlu0
    %v438 = vpop.trf.xlu0
    %v439 = vpack.c.bf16 %v424, %v423
    %v440 = vpack.c.bf16 %v426, %v425
    %v441 = vpack.c.bf16 %v428, %v427
    %v442 = vpack.c.bf16 %v430, %v429
    %v443 = vpack.c.bf16 %v432, %v431
    %v444 = vpack.c.bf16 %v434, %v433
    %v445 = vpack.c.bf16 %v436, %v435
    %v446 = vpack.c.bf16 %v438, %v437
    %v447 = vld [vmem:[%s3] sm:$0x3]
    %v448 = vld [vmem:[%s4] sm:$0xf]
    %450 = vset.pattern.permute.xlu0 0
    %451 = vperm.xlu0 %450, %v448
    %v452 = vpop.permute.xlu0 %451
    %454 = vmatprep.subr.bf16.mxu0 0
    %455 = vmatpush1.bf16.msra.mxu0 %v439
    %456 = vmatprep.subr.bf16.mxu0 0
    %457 = vmatpush1.bf16.msra.mxu0 %v440
    %458 = vmatprep.subr.bf16.mxu0 0
    %459 = vmatpush1.bf16.msra.mxu0 %v441
    %460 = vmatprep.subr.bf16.mxu0 0
    %461 = vmatpush1.bf16.msra.mxu0 %v442
    %462 = vmatprep.subr.bf16.mxu0 0
    %463 = vmatpush1.bf16.msra.mxu0 %v443
    %464 = vmatprep.subr.bf16.mxu0 0
    %465 = vmatpush1.bf16.msra.mxu0 %v444
    %466 = vmatprep.subr.bf16.mxu0 0
    %467 = vmatpush1.bf16.msra.mxu0 %v445
    %468 = vmatprep.subr.bf16.mxu0 0
    %469 = vmatpush1.bf16.msra.mxu0 %v446
    %470 = vmatprep.subr.bf16.mxu0 0
    %471 = vmatpush1.bf16.msra.mxu0 0
    %472 = vmatprep.subr.bf16.mxu0 0
    %473 = vmatpush1.bf16.msra.mxu0 0
    %474 = vmatprep.subr.bf16.mxu0 0
    %475 = vmatpush1.bf16.msra.mxu0 0
    %476 = vmatprep.subr.bf16.mxu0 0
    %477 = vmatpush1.bf16.msra.mxu0 0
    %478 = vmatprep.subr.bf16.mxu0 0
    %479 = vmatpush1.bf16.msra.mxu0 0
    %480 = vmatprep.subr.bf16.mxu0 0
    %481 = vmatpush1.bf16.msra.mxu0 0
    %482 = vmatprep.subr.bf16.mxu0 0
    %483 = vmatpush1.bf16.msra.mxu0 0
    %484 = vmatprep.subr.bf16.mxu0 0
    %485 = vmatpush1.bf16.msra.mxu0 0
    %486 = vmatprep.mubr.bf16.mxu0 0
    %487 = vmatmul.mubr.bf16.gmra.mrb[0].mxu0 %v447
    %v488 = vpop.f32.mrb[0].mxu0
    %v489 = vadd.f32 %v452, %v488
    %v490 = vpop.f32.mrb[0].mxu0
    %v491 = vpop.f32.mrb[0].mxu0
    %v492 = vpop.f32.mrb[0].mxu0
    %493 = vdwg.mxu0
    %v494 = vlaneseq
    %v495 = vshrl.u32 %v494, 7
    %v496 = vxor.u32 %v489, 2147483648
    %v497 = vmul.f32 %v496, 1.442695
    %v498 = vpow.pop %v497
    %v499 = vadd.f32 %v498, 1.0
    %v500 = vrcp.pop %v499
    %v501 = vmul.f32 1.0, %v500
    %v502 = vmul.f32 %v501, 1.002
    %v503 = vsub.f32 %v502, 0.001
    %vm504 = vcmp.eq.s32.totalorder %v495, 0
    %v505 = vsel %vm504, %v489, %v503
    %506 = vst [vmem:[#allocation2] sm:$0xf] %v505
    // Predicated region
    $region22: #{tpu_custom_call.1} parent=1 // pred_check
      _
    $region23: #{tpu_custom_call.1} parent=1 // pred_check_branch
      %508 = sbr.rel (0) target = $region25
    $region24: #{tpu_custom_call.1} parent=1 // pred_region
      %s510 = ssub.s32 64, 64
      %511 = vsyncadd [#allocation3], %s510
      %s513 = sshll.u32 [#allocation2], 4
      %s514 = int_to_ptr.vmem [resolvable:$true] %s513
      %516 = dma.vmem_to_hbm [thread:$0]  %s514, 64, %s5, [#allocation3]
    $region25: #{tpu_custom_call.1} parent=1 // pred_fallthru
      _
    // Predicated region
    $region26: #{tpu_custom_call.1} parent=1 // pred_check
      _
    $region27: #{tpu_custom_call.1} parent=1 // pred_check_branch
      %518 = sbr.rel (0) target = $region29
    $region28: #{tpu_custom_call.1} parent=1 // pred_region
      %519 = dma.done [#allocation3], 64
    $region29: #{tpu_custom_call.1} parent=1 // pred_fallthru
      _
    %520 = vsyncpa [#allocation3], 1

</llo_original>
